<compile_context>
chip_gen: v6e
topology: v6e:2x2x1
jax: 0.10.0
libtpu: 0.0.40
codegen_flags: <defaults>
</compile_context>

<pallas_src>
import jax
import jax.numpy as jnp
from jax.experimental import pallas as pl
from jax.experimental.pallas import tpu as pltpu


def _interp_matrix(out_size: int, in_size: int) -> jnp.ndarray:
    """Bilinear interpolation matrix M (out_size, in_size): out = M @ in (along that axis)."""
    scale = in_size / out_size
    src = (jnp.arange(out_size, dtype=jnp.float32) + 0.5) * scale - 0.5
    src = jnp.clip(src, 0.0, float(in_size - 1))
    i0 = jnp.floor(src).astype(jnp.int32)
    i1 = jnp.minimum(i0 + 1, in_size - 1)
    frac = src - i0.astype(jnp.float32)
    rows = jnp.arange(out_size)
    m = jnp.zeros((out_size, in_size), dtype=jnp.float32)
    m = m.at[rows, i0].add(1.0 - frac)
    m = m.at[rows, i1].add(frac)
    return m


def _resize_kernel(ry_ref, x_ref, rxc_ref, o_ref):
    # ry_ref  : (S, H)        height interpolation matrix
    # x_ref   : (H, W*C)      HWC image viewed as a lane-dense matrix (no transpose done)
    # rxc_ref : (W*C, S*C)    kron(Rx^T, I_C): width interpolation, channel-preserving
    # o_ref   : (S, S*C)      resized image, (s, t*C + c) layout
    tmp = jnp.dot(ry_ref[...], x_ref[...], preferred_element_type=jnp.float32)   # (S, W*C)
    o_ref[...] = jnp.dot(tmp, rxc_ref[...], preferred_element_type=jnp.float32)  # (S, S*C)


def grey_augmentation(x_hwc: jnp.ndarray, image_size: int) -> jnp.ndarray:
    """Forward pass of GreyAugmentation: bilinear resize to (image_size, image_size) + HWC->CHW."""
    H, W, C = x_hwc.shape
    S = image_size

    # Free metadata reshape: HWC stays in place, viewed as (H, W*C).
    x_flat = x_hwc.astype(jnp.float32).reshape(H, W * C)

    ry = _interp_matrix(S, H)                                   # (S, H)
    rx = _interp_matrix(S, W)                                   # (S, W)
    # Channel-preserving width interpolation: Rxc[w*C + c, t*C + c] = rx[t, w].
    rxc = jnp.kron(rx.T, jnp.eye(C, dtype=jnp.float32))         # (W*C, S*C)

    out_flat = pl.pallas_call(
        _resize_kernel,
        out_shape=jax.ShapeDtypeStruct((S, S * C), jnp.float32),
        in_specs=[
            pl.BlockSpec(memory_space=pltpu.MemorySpace.VMEM),   # Ry, whole array resident
            pl.BlockSpec(memory_space=pltpu.MemorySpace.VMEM),   # image (H, W*C)
            pl.BlockSpec(memory_space=pltpu.MemorySpace.VMEM),   # Rxc
        ],
        out_specs=pl.BlockSpec(memory_space=pltpu.MemorySpace.VMEM),
    )(ry, x_flat, rxc)

    # ToTensorV2 layout glue on the (small) resized output: (S, S*C) -> (S, S, C) -> (C, S, S).
    return out_flat.reshape(S, S, C).transpose(2, 0, 1)


def _reference(x_hwc: jnp.ndarray, image_size: int) -> jnp.ndarray:
    """Pure-JAX reference: same separable bilinear resize + HWC->CHW."""
    H, W, C = x_hwc.shape
    ry = _interp_matrix(image_size, H)
    rx = _interp_matrix(image_size, W)
    x_chw = jnp.transpose(x_hwc, (2, 0, 1)).astype(jnp.float32)
    return jnp.einsum("sh,chw,tw->cst", ry, x_chw, rx)


if __name__ == "__main__":
    key = jax.random.PRNGKey(0)
    H, W, C = 24, 32, 3
    IMAGE_SIZE = 16

    x = jax.random.uniform(key, (H, W, C), dtype=jnp.float32)

    out = grey_augmentation(x, IMAGE_SIZE)
    out = jax.block_until_ready(out)

    ref = _reference(x, IMAGE_SIZE)
    assert out.shape == (C, IMAGE_SIZE, IMAGE_SIZE), out.shape
    assert jnp.allclose(out, ref, atol=1e-5, rtol=1e-5), float(jnp.max(jnp.abs(out - ref)))

    print("KERNEL_OK")
</pallas_src>

<mosaic_0001>
module attributes {stable_mosaic.version = 11 : i64} {
  func.func @_resize_kernel(%arg0: memref<16x24xf32, #tpu.memory_space<vmem>>, %arg1: memref<24x96xf32, #tpu.memory_space<vmem>>, %arg2: memref<96x48xf32, #tpu.memory_space<vmem>>, %arg3: memref<16x48xf32, #tpu.memory_space<vmem>>) attributes {dimension_semantics = [], scalar_prefetch = 0 : i64, scratch_operands = 0 : i64, tpu.core_type = #tpu.core_type<tc>} {
    %c0 = arith.constant 0 : index
    %c0_0 = arith.constant 0 : index
    %0 = vector.load %arg0[%c0, %c0_0] : memref<16x24xf32, #tpu.memory_space<vmem>>, vector<16x24xf32>
    %c0_1 = arith.constant 0 : index
    %c0_2 = arith.constant 0 : index
    %1 = vector.load %arg1[%c0_1, %c0_2] : memref<24x96xf32, #tpu.memory_space<vmem>>, vector<24x96xf32>
    %cst = arith.constant dense<0.000000e+00> : vector<16x96xf32>
    %2 = tpu.matmul %0, %1, %cst {dimension_numbers = #tpu.dot_dimension_numbers<[1], [0], [0], [1], [0, 0, 1, 1], [], []>} : vector<16x24xf32>, vector<24x96xf32>, vector<16x96xf32> -> vector<16x96xf32>
    %c0_3 = arith.constant 0 : index
    %c0_4 = arith.constant 0 : index
    %3 = vector.load %arg2[%c0_3, %c0_4] : memref<96x48xf32, #tpu.memory_space<vmem>>, vector<96x48xf32>
    %cst_5 = arith.constant dense<0.000000e+00> : vector<16x48xf32>
    %4 = tpu.matmul %2, %3, %cst_5 {dimension_numbers = #tpu.dot_dimension_numbers<[1], [0], [0], [1], [0, 0, 1, 1], [], []>} : vector<16x96xf32>, vector<96x48xf32>, vector<16x48xf32> -> vector<16x48xf32>
    %c0_6 = arith.constant 0 : index
    %c0_7 = arith.constant 0 : index
    %5 = vector.load %arg3[%c0_6, %c0_7] : memref<16x48xf32, #tpu.memory_space<vmem>>, vector<16x48xf32>
    tpu.vector_store %arg3[%c0_6, %c0_7], %4 {strides = array<i32>} : memref<16x48xf32, #tpu.memory_space<vmem>>, vector<16x48xf32>,
    return
  }
}

</mosaic_0001>

<llo_original>
// kernel: tpu_custom_call.1
$region0: #{tpu_custom_call.1}
  #allocation0 [shape = 'u32[]', space=smem, size = 0x4, offset = 0x4, fixed_abs, tag = 'smem constant byte address 0x4 - core index']
  #allocation1 [shape = 'u32[144,128]{1,0:T(1,128)}', space=vmem, size = 0x12000, scoped, tag = 'internal scratch']
  %s0 = inlined_call_operand.vmem [shape: f32[16,24], index: 0, kind: input, shape index: {}]
  %s1 = inlined_call_operand.vmem [shape: f32[24,96], index: 1, kind: input, shape index: {}]
  %s2 = inlined_call_operand.vmem [shape: f32[96,48], index: 2, kind: input, shape index: {}]
  %s3 = inlined_call_operand.hbm [shape: f32[16,48], index: 3, kind: output, shape index: {}]
  %s4 = sld [smem:[#allocation0]]
  $region22: #{tpu_custom_call.1} parent=0
    _
  %s6 = ssub.s32 1, %s4
  %s7 = scalar_select 0, %s6, %s4
  $region1: #{tpu_custom_call.1} parent=0
    #allocation2 [shape = 'u8[8192]{0}', space=vmem, size = 0x2000, scoped, tag = 'output window, operand 0, single buffered']
    #allocation3 [shape = 's32[1]{0}', space=sflag, size = 0x4, scoped, tag = 'scoped memory for tpu_custom_call.1']
    %8 = vsyncpa [#allocation3], 0
    // Predicated region
    $region2: #{tpu_custom_call.1} parent=1 // pred_check
      _
    $region3: #{tpu_custom_call.1} parent=1 // pred_check_branch
      %10 = sbr.rel (0) target = $region5
    $region4: #{tpu_custom_call.1} parent=1 // pred_region
      _
    $region5: #{tpu_custom_call.1} parent=1 // pred_fallthru
      _
    // Predicated region
    $region6: #{tpu_custom_call.1} parent=1 // pred_check
      _
    $region7: #{tpu_custom_call.1} parent=1 // pred_check_branch
      %12 = sbr.rel (0) target = $region9
    $region8: #{tpu_custom_call.1} parent=1 // pred_region
      _
    $region9: #{tpu_custom_call.1} parent=1 // pred_fallthru
      _
    // Predicated region
    $region10: #{tpu_custom_call.1} parent=1 // pred_check
      _
    $region11: #{tpu_custom_call.1} parent=1 // pred_check_branch
      %14 = sbr.rel (0) target = $region13
    $region12: #{tpu_custom_call.1} parent=1 // pred_region
      _
    $region13: #{tpu_custom_call.1} parent=1 // pred_fallthru
      _
    %v15 = vld [vmem:[%s0] sm:$0xff]
    %v16 = vld [vmem:[%s0 + $0x8] sm:$0xff]
    %v17 = vld [vmem:[%s1] sm:$0xff]
    %v18 = vld [vmem:[%s1 + $0x8] sm:$0xff]
    %v19 = vld [vmem:[%s1 + $0x10] sm:$0xff]
    %vm20 = vcmask 195584
    %v22 = vsel %vm20, %v15, 0
    %v25 = vsel %vm20, %v16, 0
    %27 = vmatprep.subr.mxu0 0.0
    %28 = vmatpush1.msra.mxu0 0.0
    %29 = vmatprep.subr.mxu0 0.0
    %30 = vmatpush1.msra.mxu0 0.0
    %31 = vmatprep.subr.mxu0 0.0
    %32 = vmatpush1.msra.mxu0 0.0
    %33 = vmatprep.subr.mxu0 0.0
    %34 = vmatpush1.msra.mxu0 0.0
    %35 = vmatprep.subr.mxu0 0.0
    %36 = vmatpush1.msra.mxu0 0.0
    %37 = vmatprep.subr.mxu0 0.0
    %38 = vmatpush1.msra.mxu0 0.0
    %39 = vmatprep.subr.mxu0 0.0
    %40 = vmatpush1.msra.mxu0 0.0
    %41 = vmatprep.subr.mxu0 0.0
    %42 = vmatpush1.msra.mxu0 0.0
    %43 = vmatprep.subr.mxu0 0.0
    %44 = vmatpush1.msra.mxu0 0.0
    %45 = vmatprep.subr.mxu0 0.0
    %46 = vmatpush1.msra.mxu0 0.0
    %47 = vmatprep.subr.mxu0 0.0
    %48 = vmatpush1.msra.mxu0 0.0
    %49 = vmatprep.subr.mxu0 0.0
    %50 = vmatpush1.msra.mxu0 0.0
    %51 = vmatprep.subr.mxu0 0.0
    %52 = vmatpush1.msra.mxu0 0.0
    %53 = vmatprep.subr.mxu0 0.0
    %54 = vmatpush1.msra.mxu0 %v19
    %55 = vmatprep.subr.mxu0 0.0
    %56 = vmatpush1.msra.mxu0 %v18
    %57 = vmatprep.subr.mxu0 0.0
    %58 = vmatpush1.msra.mxu0 %v17
    %59 = vmatprep.subr.mxu0 0.0
    %60 = vmatpush2.msra.mxu0 0.0
    %61 = vmatprep.subr.mxu0 0.0
    %62 = vmatpush2.msra.mxu0 0.0
    %63 = vmatprep.subr.mxu0 0.0
    %64 = vmatpush2.msra.mxu0 0.0
    %65 = vmatprep.subr.mxu0 0.0
    %66 = vmatpush2.msra.mxu0 0.0
    %67 = vmatprep.subr.mxu0 0.0
    %68 = vmatpush2.msra.mxu0 0.0
    %69 = vmatprep.subr.mxu0 0.0
    %70 = vmatpush2.msra.mxu0 0.0
    %71 = vmatprep.subr.mxu0 0.0
    %72 = vmatpush2.msra.mxu0 0.0
    %73 = vmatprep.subr.mxu0 0.0
    %74 = vmatpush2.msra.mxu0 0.0
    %75 = vmatprep.subr.mxu0 0.0
    %76 = vmatpush2.msra.mxu0 0.0
    %77 = vmatprep.subr.mxu0 0.0
    %78 = vmatpush2.msra.mxu0 0.0
    %79 = vmatprep.subr.mxu0 0.0
    %80 = vmatpush2.msra.mxu0 0.0
    %81 = vmatprep.subr.mxu0 0.0
    %82 = vmatpush2.msra.mxu0 0.0
    %83 = vmatprep.subr.mxu0 0.0
    %84 = vmatpush2.msra.mxu0 0.0
    %85 = vmatprep.subr.mxu0 0.0
    %86 = vmatpush2.msra.mxu0 0.0
    %87 = vmatprep.subr.mxu0 0.0
    %88 = vmatpush2.msra.mxu0 0.0
    %89 = vmatprep.subr.mxu0 0.0
    %90 = vmatpush2.msra.mxu0 0.0
    %91 = vmatprep.mubr.f32.mxu0 0.0
    %92 = vmatmul.mubr.f32.gmra.mxu0 %v22
    %v93 = vpop.f32.mrf.mxu0
    %v94 = vadd.f32 0.0, %v93
    %v95 = vpop.f32.mrf.mxu0
    %96 = vmatprep.mubr.f32.mxu0 0.0
    %97 = vmatmul.mubr.f32.gmra.mxu0 %v25
    %v98 = vpop.f32.mrf.mxu0
    %v99 = vadd.f32 0.0, %v98
    %v100 = vpop.f32.mrf.mxu0
    %101 = vdwg.mxu0
    %v102 = vld [vmem:[%s2] sm:$0xff]
    %v103 = vld [vmem:[%s2 + $0x8] sm:$0xff]
    %v104 = vld [vmem:[%s2 + $0x10] sm:$0xff]
    %v105 = vld [vmem:[%s2 + $0x18] sm:$0xff]
    %v106 = vld [vmem:[%s2 + $0x20] sm:$0xff]
    %v107 = vld [vmem:[%s2 + $0x28] sm:$0xff]
    %v108 = vld [vmem:[%s2 + $0x30] sm:$0xff]
    %v109 = vld [vmem:[%s2 + $0x38] sm:$0xff]
    %v110 = vld [vmem:[%s2 + $0x40] sm:$0xff]
    %v111 = vld [vmem:[%s2 + $0x48] sm:$0xff]
    %v112 = vld [vmem:[%s2 + $0x50] sm:$0xff]
    %v113 = vld [vmem:[%s2 + $0x58] sm:$0xff]
    %vm114 = vcmask 785408
    %v116 = vsel %vm114, %v94, 0
    %v119 = vsel %vm114, %v99, 0
    %121 = vmatprep.subr.mxu0 0.0
    %122 = vmatpush1.msra.mxu0 0.0
    %123 = vmatprep.subr.mxu0 0.0
    %124 = vmatpush1.msra.mxu0 0.0
    %125 = vmatprep.subr.mxu0 0.0
    %126 = vmatpush1.msra.mxu0 0.0
    %127 = vmatprep.subr.mxu0 0.0
    %128 = vmatpush1.msra.mxu0 0.0
    %129 = vmatprep.subr.mxu0 0.0
    %130 = vmatpush1.msra.mxu0 %v113
    %131 = vmatprep.subr.mxu0 0.0
    %132 = vmatpush1.msra.mxu0 %v112
    %133 = vmatprep.subr.mxu0 0.0
    %134 = vmatpush1.msra.mxu0 %v111
    %135 = vmatprep.subr.mxu0 0.0
    %136 = vmatpush1.msra.mxu0 %v110
    %137 = vmatprep.subr.mxu0 0.0
    %138 = vmatpush1.msra.mxu0 %v109
    %139 = vmatprep.subr.mxu0 0.0
    %140 = vmatpush1.msra.mxu0 %v108
    %141 = vmatprep.subr.mxu0 0.0
    %142 = vmatpush1.msra.mxu0 %v107
    %143 = vmatprep.subr.mxu0 0.0
    %144 = vmatpush1.msra.mxu0 %v106
    %145 = vmatprep.subr.mxu0 0.0
    %146 = vmatpush1.msra.mxu0 %v105
    %147 = vmatprep.subr.mxu0 0.0
    %148 = vmatpush1.msra.mxu0 %v104
    %149 = vmatprep.subr.mxu0 0.0
    %150 = vmatpush1.msra.mxu0 %v103
    %151 = vmatprep.subr.mxu0 0.0
    %152 = vmatpush1.msra.mxu0 %v102
    %153 = vmatprep.subr.mxu0 0.0
    %154 = vmatpush2.msra.mxu0 0.0
    %155 = vmatprep.subr.mxu0 0.0
    %156 = vmatpush2.msra.mxu0 0.0
    %157 = vmatprep.subr.mxu0 0.0
    %158 = vmatpush2.msra.mxu0 0.0
    %159 = vmatprep.subr.mxu0 0.0
    %160 = vmatpush2.msra.mxu0 0.0
    %161 = vmatprep.subr.mxu0 0.0
    %162 = vmatpush2.msra.mxu0 0.0
    %163 = vmatprep.subr.mxu0 0.0
    %164 = vmatpush2.msra.mxu0 0.0
    %165 = vmatprep.subr.mxu0 0.0
    %166 = vmatpush2.msra.mxu0 0.0
    %167 = vmatprep.subr.mxu0 0.0
    %168 = vmatpush2.msra.mxu0 0.0
    %169 = vmatprep.subr.mxu0 0.0
    %170 = vmatpush2.msra.mxu0 0.0
    %171 = vmatprep.subr.mxu0 0.0
    %172 = vmatpush2.msra.mxu0 0.0
    %173 = vmatprep.subr.mxu0 0.0
    %174 = vmatpush2.msra.mxu0 0.0
    %175 = vmatprep.subr.mxu0 0.0
    %176 = vmatpush2.msra.mxu0 0.0
    %177 = vmatprep.subr.mxu0 0.0
    %178 = vmatpush2.msra.mxu0 0.0
    %179 = vmatprep.subr.mxu0 0.0
    %180 = vmatpush2.msra.mxu0 0.0
    %181 = vmatprep.subr.mxu0 0.0
    %182 = vmatpush2.msra.mxu0 0.0
    %183 = vmatprep.subr.mxu0 0.0
    %184 = vmatpush2.msra.mxu0 0.0
    %185 = vmatprep.mubr.f32.mxu0 0.0
    %186 = vmatmul.mubr.f32.gmra.mxu0 %v116
    %v187 = vpop.f32.mrf.mxu0
    %v188 = vadd.f32 0.0, %v187
    %v189 = vpop.f32.mrf.mxu0
    %190 = vmatprep.mubr.f32.mxu0 0.0
    %191 = vmatmul.mubr.f32.gmra.mxu0 %v119
    %v192 = vpop.f32.mrf.mxu0
    %v193 = vadd.f32 0.0, %v192
    %v194 = vpop.f32.mrf.mxu0
    %195 = vdwg.mxu0
    %vm196 = vcmask 392192
    %197 = vst.msk [vmem:[#allocation2] sm:$0xff] %vm196, %v188
    %198 = vst.msk [vmem:[#allocation2 + $0x8] sm:$0xff] %vm196, %v193
    // Predicated region
    $region14: #{tpu_custom_call.1} parent=1 // pred_check
      _
    $region15: #{tpu_custom_call.1} parent=1 // pred_check_branch
      %200 = sbr.rel (0) target = $region17
    $region16: #{tpu_custom_call.1} parent=1 // pred_region
      %s202 = ssub.s32 256, 256
      %203 = vsyncadd [#allocation3], %s202
      %s204 = sshll.u32 [#allocation2], 4
      %s205 = int_to_ptr.vmem [resolvable:$true] %s204
      %210 = dma.vmem_to_hbm [thread:$0]  %s205, 256, %s3, [#allocation3], 128, 128, 8
    $region17: #{tpu_custom_call.1} parent=1 // pred_fallthru
      _
    // Predicated region
    $region18: #{tpu_custom_call.1} parent=1 // pred_check
      _
    $region19: #{tpu_custom_call.1} parent=1 // pred_check_branch
      %212 = sbr.rel (0) target = $region21
    $region20: #{tpu_custom_call.1} parent=1 // pred_region
      %213 = dma.done [#allocation3], 256
    $region21: #{tpu_custom_call.1} parent=1 // pred_fallthru
      _
    %214 = vsyncpa [#allocation3], 1

</llo_original>
